<compile_context>
chip_gen: v7x
topology: tpu7x:2x2x1
jax: 0.10.0
libtpu: 0.0.40
codegen_flags: <defaults>
</compile_context>

<pallas_src>
import jax
import jax.numpy as jnp
from jax import lax
from jax.experimental import pallas as pl
from jax.experimental.pallas import tpu as pltpu


# ---------------------------------------------------------------------------
# W-direction pooling helpers (operate on an in-register (rows, 2*wo) value).
# ---------------------------------------------------------------------------


def _pool_w_roll(v, wo, lane):
    """out[:, j] = max(v[:, 2j], v[:, 2j+1]); lane movement via pltpu.roll (XLU)."""
    _, wi = v.shape  # wi == 2 * wo, multiple of 128 on this path

    def shl(a, s):
        # Circular left shift by s lanes; only lanes that never wrap are used
        # downstream, so the wrapped tail is harmless filler.
        return pltpu.roll(a, (wi - s) % wi, 1)

    # Pairwise neighbour max: even lane 2j now holds the full 2x2 window max.
    v = jnp.maximum(v, shl(v, 1))
    # Log-step compaction of even lanes 2j -> j (static select pattern/stage).
    sh, k = 1, 0
    while sh < wo:
        take = ((lane >> k) & 3) == 1          # lane mod 4*sh in [sh, 2*sh)
        v = jnp.where(take, shl(v, sh), v)
        sh, k = sh * 2, k + 1
    return v[:, :wo]


def _shift_left_into(dst_ref, src_ref, shift):
    """dst[:, i] = src[:, i + shift] for i < W - shift; tail lanes are filler."""
    w = src_ref.shape[-1]
    dst_ref[:, : w - shift] = src_ref[:, shift:]
    dst_ref[:, w - shift:] = src_ref[:, w - shift:]


def _pool_w_shuffle(v, wo, lane, cur_ref, sft_ref):
    """Same result as _pool_w_roll, via small per-chunk VMEM scratch (any width)."""
    _, wi = v.shape
    cur_ref[...] = v
    _shift_left_into(sft_ref, cur_ref, 1)
    v = jnp.maximum(v, sft_ref[...])
    sh, k = 1, 0
    while sh < wo:
        cur_ref[...] = v
        _shift_left_into(sft_ref, cur_ref, sh)
        take = ((lane >> k) & 3) == 1
        v = jnp.where(take, sft_ref[...], v)
        sh, k = sh * 2, k + 1
    return v[:, :wo]


# ---------------------------------------------------------------------------
# Kernel
# ---------------------------------------------------------------------------


def _make_kernel(w, wo, ck, use_roll):
    wi = 2 * wo

    def kernel(x_ref, o_ref, *scratch):
        # x_ref: (tr, 2*w)  one pooling strip (two image rows) per row
        # o_ref: (tr, wo)
        tr = o_ref.shape[0]
        # Hoisted out of the chunk loop (JAX does not CSE broadcast/iota).
        lane = lax.broadcasted_iota(jnp.int32, (ck, wi), 1)

        def do_chunk(r0):
            top = x_ref[pl.ds(r0, ck), pl.ds(0, wi)]
            bot = x_ref[pl.ds(r0, ck), pl.ds(w, wi)]
            v = jnp.maximum(top, bot)              # H-direction max (VPU)
            if use_roll:
                out = _pool_w_roll(v, wo, lane)
            else:
                out = _pool_w_shuffle(v, wo, lane, scratch[0], scratch[1])
            o_ref[pl.ds(r0, ck), :] = out

        n_chunks = tr // ck

        def body(i, carry):
            r0 = i * ck
            if ck % 8 == 0:
                r0 = pl.multiple_of(r0, 8)
            do_chunk(r0)
            return carry

        lax.fori_loop(0, n_chunks, body, 0)
        if tr % ck:                                 # overlapping tail (idempotent)
            do_chunk(tr - ck)

    return kernel


# ---------------------------------------------------------------------------
# Wrapper / tiling
# ---------------------------------------------------------------------------


def _vmem_capacity_bytes():
    try:
        return int(pltpu.get_tpu_info().vmem_capacity_bytes)
    except Exception:
        return 64 * 1024 * 1024  # conservative (v7x per-TensorCore VMEM)


def _choose_tiling(r, w, wo, itemsize, block_rows=None):
    wi = 2 * wo
    # Rows per in-register chunk: keep the live (ck, wi) value to <= ~8 vregs.
    ck = (8192 // max(wi, 1)) // 8 * 8
    ck = max(8, min(32, ck))

    if block_rows is not None:                    # test / tuning override
        tr = max(8, min(r, (int(block_rows) // 8) * 8))
        return min(ck, tr), tr

    if r <= ck:
        return r, r

    row_bytes = 2 * w * itemsize
    cap = _vmem_capacity_bytes()
    # Real-input bytes per pipeline buffer (smaller budget on v7x's 64 MiB VMEM).
    in_budget = (8 << 20) if cap <= (64 << 20) else (16 << 20)
    rows_budget = max(ck, in_budget // max(row_bytes, 1))
    rows_split = -(-r // 8)                       # aim for >= 8 grid steps (TC balance)
    rows_floor = max(ck, (2 << 20) // max(row_bytes, 1))   # >= ~2 MiB real per block
    tr = max(rows_floor, min(rows_budget, rows_split))
    tr = max(ck, (tr // ck) * ck)
    if tr >= r:
        tr = r
    return ck, tr


def max_pool_2x2(x, *, block_rows=None):
    """nn.MaxPool2d(kernel_size=2, stride=2) over an NCHW tensor (floor mode)."""
    n, c, h, w = x.shape
    ho, wo = h // 2, w // 2
    if ho == 0 or wo == 0:
        return jnp.zeros((n, c, ho, wo), x.dtype)
    if h != 2 * ho:
        # Odd H: drop the trailing row (PyTorch floor semantics).  Odd W is
        # handled inside the kernel without an extra HBM pass.
        x = x[:, :, : 2 * ho, :]

    r = n * c * ho
    wi = 2 * wo
    itemsize = x.dtype.itemsize
    use_roll = (wi % 128 == 0)

    # Free reshape: one lane-dense row per pooling strip = [row 2i | row 2i+1].
    xr = x.reshape(r, 2 * w)

    ck, tr = _choose_tiling(r, w, wo, itemsize, block_rows)
    grid = (pl.cdiv(r, tr),)

    scratch_shapes = []
    scratch_bytes = 0
    if not use_roll:
        scratch_shapes = [pltpu.VMEM((ck, wi), x.dtype),
                          pltpu.VMEM((ck, wi), x.dtype)]
        scratch_bytes = 2 * ck * wi * itemsize

    in_block = tr * 2 * w * itemsize
    out_block = tr * wo * itemsize
    cap = _vmem_capacity_bytes()
    vmem_limit = 2 * (in_block + out_block) + scratch_bytes + (8 << 20)
    vmem_limit = int(min(max(vmem_limit, 32 << 20), int(0.8 * cap)))

    out = pl.pallas_call(
        _make_kernel(w, wo, ck, use_roll),
        out_shape=jax.ShapeDtypeStruct((r, wo), x.dtype),
        grid_spec=pltpu.PrefetchScalarGridSpec(
            num_scalar_prefetch=0,
            grid=grid,
            in_specs=[pl.BlockSpec((tr, 2 * w), lambda i: (i, 0))],
            out_specs=pl.BlockSpec((tr, wo), lambda i: (i, 0)),
            scratch_shapes=scratch_shapes,
        ),
        compiler_params=pltpu.CompilerParams(
            dimension_semantics=("parallel",),
            vmem_limit_bytes=vmem_limit,
        ),
        cost_estimate=pl.CostEstimate(
            flops=3 * r * wo,
            transcendentals=0,
            bytes_accessed=(r * 2 * w + r * wo) * itemsize,
        ),
    )(xr)

    # Free reshape back to NCHW.
    return out.reshape(n, c, ho, wo)


def _reference_maxpool(x):
    # Pure-JAX reference (same semantics as nn.MaxPool2d(2, 2)).
    n, c, h, w = x.shape
    ho, wo = h // 2, w // 2
    xr = x[:, :, : 2 * ho, : 2 * wo].reshape(n, c, ho, 2, wo, 2)
    return xr.max(axis=(3, 5))


if __name__ == "__main__":
    # Small shape implied by the module (batch=2, channels=4, spatial=16).
    x = jax.random.normal(jax.random.PRNGKey(0), (2, 4, 16, 16), jnp.float32)
    y = jax.block_until_ready(max_pool_2x2(x))
    assert y.shape == (2, 4, 8, 8), y.shape
    assert jnp.array_equal(y, _reference_maxpool(x)), "mismatch (small / shuffle path)"

    # Lane-aligned width -> in-register roll fast path + multi-chunk inner loop.
    x2 = jax.random.normal(jax.random.PRNGKey(1), (1, 4, 64, 256), jnp.float32)
    y2 = jax.block_until_ready(max_pool_2x2(x2))
    assert y2.shape == (1, 4, 32, 128), y2.shape
    assert jnp.array_equal(y2, _reference_maxpool(x2)), "mismatch (roll path)"

    # Odd H and odd W (floor semantics), non-power-of-two output width.
    x3 = jax.random.normal(jax.random.PRNGKey(2), (1, 3, 9, 13), jnp.float32)
    y3 = jax.block_until_ready(max_pool_2x2(x3))
    assert y3.shape == (1, 3, 4, 6), y3.shape
    assert jnp.array_equal(y3, _reference_maxpool(x3)), "mismatch (odd shapes)"

    # Multi-block grid with a remainder block (forced small row block).
    y4 = jax.block_until_ready(max_pool_2x2(x, block_rows=24))
    assert jnp.array_equal(y4, _reference_maxpool(x)), "mismatch (multi-block path)"

    print("KERNEL_OK")
</pallas_src>

<mosaic_0001>
module attributes {stable_mosaic.version = 11 : i64} {
  func.func @kernel(%arg0: i32, %arg1: memref<64x32xf32, #tpu.memory_space<vmem>>, %arg2: memref<64x8xf32, #tpu.memory_space<vmem>>, %arg3: memref<32x16xf32, #tpu.memory_space<vmem>>, %arg4: memref<32x16xf32, #tpu.memory_space<vmem>>) attributes {dimension_semantics = [#tpu.dimension_semantics<parallel>], iteration_bounds = array<i64: 1>, scalar_prefetch = 0 : i64, scratch_operands = 2 : i64, tpu.core_type = #tpu.core_type<tc>, window_params = [{transform_indices = @transform_0, window_bounds = array<i64: 64, 32>}, {transform_indices = @transform_1, window_bounds = array<i64: 64, 8>}]} {
    %0 = tpu.iota {dimensions = array<i32: 1>} : vector<32x16xi32>
    %c0_i32 = arith.constant 0 : i32
    %c2_i32 = arith.constant 2 : i32
    %1 = arith.addi %c0_i32, %c2_i32 : i32
    %c1_i32 = arith.constant 1 : i32
    scf.for %arg5 = %c0_i32 to %1 step %c1_i32  : i32 {
      %c32_i32 = arith.constant 32 : i32
      %2 = arith.muli %arg5, %c32_i32 : i32
      %3 = tpu.assume_multiple %2, 8 : i32
      %4 = arith.index_cast %3 : i32 to index
      %c0 = arith.constant 0 : index
      %5 = vector.load %arg1[%4, %c0] : memref<64x32xf32, #tpu.memory_space<vmem>>, vector<32x16xf32>
      %6 = arith.index_cast %3 : i32 to index
      %c16 = arith.constant 16 : index
      %7 = vector.load %arg1[%6, %c16] : memref<64x32xf32, #tpu.memory_space<vmem>>, vector<32x16xf32>
      %8 = arith.maximumf %5, %7 : vector<32x16xf32>
      %c0_1 = arith.constant 0 : index
      %c0_2 = arith.constant 0 : index
      %9 = vector.load %arg3[%c0_1, %c0_2] : memref<32x16xf32, #tpu.memory_space<vmem>>, vector<32x16xf32>
      tpu.vector_store %arg3[%c0_1, %c0_2], %8 {strides = array<i32>} : memref<32x16xf32, #tpu.memory_space<vmem>>, vector<32x16xf32>,
      %c0_3 = arith.constant 0 : index
      %c1 = arith.constant 1 : index
      %10 = vector.load %arg3[%c0_3, %c1] : memref<32x16xf32, #tpu.memory_space<vmem>>, vector<32x15xf32>
      %c0_4 = arith.constant 0 : index
      %c0_5 = arith.constant 0 : index
      %11 = vector.load %arg4[%c0_4, %c0_5] : memref<32x16xf32, #tpu.memory_space<vmem>>, vector<32x15xf32>
      tpu.vector_store %arg4[%c0_4, %c0_5], %10 {strides = array<i32>} : memref<32x16xf32, #tpu.memory_space<vmem>>, vector<32x15xf32>,
      %c0_6 = arith.constant 0 : index
      %c15 = arith.constant 15 : index
      %12 = vector.load %arg3[%c0_6, %c15] : memref<32x16xf32, #tpu.memory_space<vmem>>, vector<32x1xf32>
      %c0_7 = arith.constant 0 : index
      %c15_8 = arith.constant 15 : index
      %13 = vector.load %arg4[%c0_7, %c15_8] : memref<32x16xf32, #tpu.memory_space<vmem>>, vector<32x1xf32>
      tpu.vector_store %arg4[%c0_7, %c15_8], %12 {strides = array<i32>} : memref<32x16xf32, #tpu.memory_space<vmem>>, vector<32x1xf32>,
      %c0_9 = arith.constant 0 : index
      %c0_10 = arith.constant 0 : index
      %14 = vector.load %arg4[%c0_9, %c0_10] : memref<32x16xf32, #tpu.memory_space<vmem>>, vector<32x16xf32>
      %15 = arith.maximumf %8, %14 : vector<32x16xf32>
      %c0_11 = arith.constant 0 : index
      %c0_12 = arith.constant 0 : index
      %16 = vector.load %arg3[%c0_11, %c0_12] : memref<32x16xf32, #tpu.memory_space<vmem>>, vector<32x16xf32>
      tpu.vector_store %arg3[%c0_11, %c0_12], %15 {strides = array<i32>} : memref<32x16xf32, #tpu.memory_space<vmem>>, vector<32x16xf32>,
      %c0_13 = arith.constant 0 : index
      %c1_14 = arith.constant 1 : index
      %17 = vector.load %arg3[%c0_13, %c1_14] : memref<32x16xf32, #tpu.memory_space<vmem>>, vector<32x15xf32>
      %c0_15 = arith.constant 0 : index
      %c0_16 = arith.constant 0 : index
      %18 = vector.load %arg4[%c0_15, %c0_16] : memref<32x16xf32, #tpu.memory_space<vmem>>, vector<32x15xf32>
      tpu.vector_store %arg4[%c0_15, %c0_16], %17 {strides = array<i32>} : memref<32x16xf32, #tpu.memory_space<vmem>>, vector<32x15xf32>,
      %c0_17 = arith.constant 0 : index
      %c15_18 = arith.constant 15 : index
      %19 = vector.load %arg3[%c0_17, %c15_18] : memref<32x16xf32, #tpu.memory_space<vmem>>, vector<32x1xf32>
      %c0_19 = arith.constant 0 : index
      %c15_20 = arith.constant 15 : index
      %20 = vector.load %arg4[%c0_19, %c15_20] : memref<32x16xf32, #tpu.memory_space<vmem>>, vector<32x1xf32>
      tpu.vector_store %arg4[%c0_19, %c15_20], %19 {strides = array<i32>} : memref<32x16xf32, #tpu.memory_space<vmem>>, vector<32x1xf32>,
      %c0_i32_21 = arith.constant 0 : i32
      %21 = vector.broadcast %c0_i32_21 : i32 to vector<32x16xi32>
      %22 = arith.shrsi %0, %21 : vector<32x16xi32>
      %c3_i32 = arith.constant 3 : i32
      %23 = vector.broadcast %c3_i32 : i32 to vector<32x16xi32>
      %24 = arith.andi %22, %23 : vector<32x16xi32>
      %c1_i32_22 = arith.constant 1 : i32
      %25 = vector.broadcast %c1_i32_22 : i32 to vector<32x16xi32>
      %26 = arith.cmpi eq, %24, %25 : vector<32x16xi32>
      %c0_23 = arith.constant 0 : index
      %c0_24 = arith.constant 0 : index
      %27 = vector.load %arg4[%c0_23, %c0_24] : memref<32x16xf32, #tpu.memory_space<vmem>>, vector<32x16xf32>
      %28 = arith.select %26, %27, %15 : vector<32x16xi1>, vector<32x16xf32>
      %c0_25 = arith.constant 0 : index
      %c0_26 = arith.constant 0 : index
      %29 = vector.load %arg3[%c0_25, %c0_26] : memref<32x16xf32, #tpu.memory_space<vmem>>, vector<32x16xf32>
      tpu.vector_store %arg3[%c0_25, %c0_26], %28 {strides = array<i32>} : memref<32x16xf32, #tpu.memory_space<vmem>>, vector<32x16xf32>,
      %c0_27 = arith.constant 0 : index
      %c2 = arith.constant 2 : index
      %30 = vector.load %arg3[%c0_27, %c2] : memref<32x16xf32, #tpu.memory_space<vmem>>, vector<32x14xf32>
      %c0_28 = arith.constant 0 : index
      %c0_29 = arith.constant 0 : index
      %31 = vector.load %arg4[%c0_28, %c0_29] : memref<32x16xf32, #tpu.memory_space<vmem>>, vector<32x14xf32>
      tpu.vector_store %arg4[%c0_28, %c0_29], %30 {strides = array<i32>} : memref<32x16xf32, #tpu.memory_space<vmem>>, vector<32x14xf32>,
      %c0_30 = arith.constant 0 : index
      %c14 = arith.constant 14 : index
      %32 = vector.load %arg3[%c0_30, %c14] : memref<32x16xf32, #tpu.memory_space<vmem>>, vector<32x2xf32>
      %c0_31 = arith.constant 0 : index
      %c14_32 = arith.constant 14 : index
      %33 = vector.load %arg4[%c0_31, %c14_32] : memref<32x16xf32, #tpu.memory_space<vmem>>, vector<32x2xf32>
      tpu.vector_store %arg4[%c0_31, %c14_32], %32 {strides = array<i32>} : memref<32x16xf32, #tpu.memory_space<vmem>>, vector<32x2xf32>,
      %c1_i32_33 = arith.constant 1 : i32
      %34 = vector.broadcast %c1_i32_33 : i32 to vector<32x16xi32>
      %35 = arith.shrsi %0, %34 : vector<32x16xi32>
      %c3_i32_34 = arith.constant 3 : i32
      %36 = vector.broadcast %c3_i32_34 : i32 to vector<32x16xi32>
      %37 = arith.andi %35, %36 : vector<32x16xi32>
      %c1_i32_35 = arith.constant 1 : i32
      %38 = vector.broadcast %c1_i32_35 : i32 to vector<32x16xi32>
      %39 = arith.cmpi eq, %37, %38 : vector<32x16xi32>
      %c0_36 = arith.constant 0 : index
      %c0_37 = arith.constant 0 : index
      %40 = vector.load %arg4[%c0_36, %c0_37] : memref<32x16xf32, #tpu.memory_space<vmem>>, vector<32x16xf32>
      %41 = arith.select %39, %40, %28 : vector<32x16xi1>, vector<32x16xf32>
      %c0_38 = arith.constant 0 : index
      %c0_39 = arith.constant 0 : index
      %42 = vector.load %arg3[%c0_38, %c0_39] : memref<32x16xf32, #tpu.memory_space<vmem>>, vector<32x16xf32>
      tpu.vector_store %arg3[%c0_38, %c0_39], %41 {strides = array<i32>} : memref<32x16xf32, #tpu.memory_space<vmem>>, vector<32x16xf32>,
      %c0_40 = arith.constant 0 : index
      %c4 = arith.constant 4 : index
      %43 = vector.load %arg3[%c0_40, %c4] : memref<32x16xf32, #tpu.memory_space<vmem>>, vector<32x12xf32>
      %c0_41 = arith.constant 0 : index
      %c0_42 = arith.constant 0 : index
      %44 = vector.load %arg4[%c0_41, %c0_42] : memref<32x16xf32, #tpu.memory_space<vmem>>, vector<32x12xf32>
      tpu.vector_store %arg4[%c0_41, %c0_42], %43 {strides = array<i32>} : memref<32x16xf32, #tpu.memory_space<vmem>>, vector<32x12xf32>,
      %c0_43 = arith.constant 0 : index
      %c12 = arith.constant 12 : index
      %45 = vector.load %arg3[%c0_43, %c12] : memref<32x16xf32, #tpu.memory_space<vmem>>, vector<32x4xf32>
      %c0_44 = arith.constant 0 : index
      %c12_45 = arith.constant 12 : index
      %46 = vector.load %arg4[%c0_44, %c12_45] : memref<32x16xf32, #tpu.memory_space<vmem>>, vector<32x4xf32>
      tpu.vector_store %arg4[%c0_44, %c12_45], %45 {strides = array<i32>} : memref<32x16xf32, #tpu.memory_space<vmem>>, vector<32x4xf32>,
      %c2_i32_46 = arith.constant 2 : i32
      %47 = vector.broadcast %c2_i32_46 : i32 to vector<32x16xi32>
      %48 = arith.shrsi %0, %47 : vector<32x16xi32>
      %c3_i32_47 = arith.constant 3 : i32
      %49 = vector.broadcast %c3_i32_47 : i32 to vector<32x16xi32>
      %50 = arith.andi %48, %49 : vector<32x16xi32>
      %c1_i32_48 = arith.constant 1 : i32
      %51 = vector.broadcast %c1_i32_48 : i32 to vector<32x16xi32>
      %52 = arith.cmpi eq, %50, %51 : vector<32x16xi32>
      %c0_49 = arith.constant 0 : index
      %c0_50 = arith.constant 0 : index
      %53 = vector.load %arg4[%c0_49, %c0_50] : memref<32x16xf32, #tpu.memory_space<vmem>>, vector<32x16xf32>
      %54 = arith.select %52, %53, %41 : vector<32x16xi1>, vector<32x16xf32>
      %55 = vector.extract_strided_slice %54 {offsets = [0, 0], sizes = [32, 8], strides = [1, 1]} : vector<32x16xf32> to vector<32x8xf32>
      %56 = arith.index_cast %3 : i32 to index
      %c0_51 = arith.constant 0 : index
      %57 = vector.load %arg2[%56, %c0_51] : memref<64x8xf32, #tpu.memory_space<vmem>>, vector<32x8xf32>
      tpu.vector_store %arg2[%56, %c0_51], %55 {strides = array<i32>} : memref<64x8xf32, #tpu.memory_space<vmem>>, vector<32x8xf32>,
    }
    %c2_i32_0 = arith.constant 2 : i32
    return
  }
  func.func @transform_0(%arg0: i32) -> (i32, i32) {
    %c0_i32 = arith.constant 0 : i32
    %c0_i32_0 = arith.constant 0 : i32
    return %arg0, %c0_i32 : i32, i32
  }
  func.func @transform_1(%arg0: i32) -> (i32, i32) {
    %c0_i32 = arith.constant 0 : i32
    %c0_i32_0 = arith.constant 0 : i32
    return %arg0, %c0_i32 : i32, i32
  }
}

</mosaic_0001>

<llo_original>
// kernel: tpu_custom_call.1
$region0: #{tpu_custom_call.1}
  #allocation0 [shape = 'u32[]', space=smem, size = 0x4, offset = 0x4, fixed_abs, tag = 'smem constant byte address 0x4 - core index']
  #allocation1 [shape = 'u32[144,128]{1,0:T(1,128)}', space=vmem, size = 0x12000, scoped, tag = 'internal scratch']
  #allocation2 [shape = 'f32[32,16]{1,0:T(8,128)}', space=vmem, size = 0x4000, scoped, tag = 'scratch operand']
  #allocation3 [shape = 'f32[32,16]{1,0:T(8,128)}', space=vmem, size = 0x4000, scoped, tag = 'scratch operand']
  %s0 = inlined_call_operand.vmem [shape: f32[64,32], index: 0, kind: input, shape index: {}]
  %s1 = inlined_call_operand.vmem [shape: f32[64,8], index: 1, kind: output, shape index: {}]
  %s2 = sld [smem:[#allocation0]]
  $region21: #{tpu_custom_call.1} parent=0
    _
  %s4 = ssub.s32 1, %s2
  %s5 = scalar_select 0, %s4, %s2
  // Predicated region
  $region2: #{tpu_custom_call.1} parent=0 // pred_check
    _
  $region3: #{tpu_custom_call.1} parent=0 // pred_check_branch
    %7 = sbr.rel (0) target = $region5
  $region4: #{tpu_custom_call.1} parent=0 // pred_region
    _
  $region5: #{tpu_custom_call.1} parent=0 // pred_fallthru
    _
  %v8 = vlaneseq
  %v9 = vand.u32 %v8, 127
  loop: start=0, step=1, limit=2
  $region6: #{tpu_custom_call.1} parent=0 // loop_pre_header
    _
  $region7: #{tpu_custom_call.1} parent=0 // loop_header
    %s11 = sphi 0, %s15
    %p12 = scmp.ge.s32.totalorder %s11, 2
  $region8: #{tpu_custom_call.1} parent=0 // loop_header_branch
    %14 = sbr.rel (%p12) target = $region12
  $region9: #{tpu_custom_call.1} parent=0 // loop_body
    %s16 = smul.u32 %s11, 32
    %s17 = scalar_lea.vmem %s0, %s16
    %v18 = vld [vmem:[%s17] sm:$0xff]
    %v19 = vld [vmem:[%s17 + $0x8] sm:$0xff]
    %v20 = vld [vmem:[%s17 + $0x10] sm:$0xff]
    %v21 = vld [vmem:[%s17 + $0x18] sm:$0xff]
    %26 = vrot.lane.b32.xlu0 %v18, 112
    %v27 = vpop.permute.xlu0 %26
    %28 = vrot.lane.b32.xlu0 %v19, 112
    %v29 = vpop.permute.xlu0 %28
    %30 = vrot.lane.b32.xlu0 %v20, 112
    %v31 = vpop.permute.xlu0 %30
    %32 = vrot.lane.b32.xlu0 %v21, 112
    %v33 = vpop.permute.xlu0 %32
    %v38 = vmax.f32 %v18, %v27
    %v39 = vmax.f32 %v19, %v29
    %v40 = vmax.f32 %v20, %v31
    %v41 = vmax.f32 %v21, %v33
    %vm42 = vcmask 130048
    %43 = vst.msk [vmem:[#allocation2] sm:$0xff] %vm42, %v38
    %44 = vst.msk [vmem:[#allocation2 + $0x8] sm:$0xff] %vm42, %v39
    %45 = vst.msk [vmem:[#allocation2 + $0x10] sm:$0xff] %vm42, %v40
    %46 = vst.msk [vmem:[#allocation2 + $0x18] sm:$0xff] %vm42, %v41
    %v47 = vld [vmem:[#allocation2] sm:$0xff]
    %v48 = vld [vmem:[#allocation2 + $0x8] sm:$0xff]
    %v49 = vld [vmem:[#allocation2 + $0x10] sm:$0xff]
    %v50 = vld [vmem:[#allocation2 + $0x18] sm:$0xff]
    %55 = vrot.lane.b32.xlu0 %v47, 127
    %v56 = vpop.permute.xlu0 %55
    %57 = vrot.lane.b32.xlu0 %v48, 127
    %v58 = vpop.permute.xlu0 %57
    %59 = vrot.lane.b32.xlu0 %v49, 127
    %v60 = vpop.permute.xlu0 %59
    %61 = vrot.lane.b32.xlu0 %v50, 127
    %v62 = vpop.permute.xlu0 %61
    %vm67 = vcmask 121856
    %68 = vst.msk [vmem:[#allocation3] sm:$0xff] %vm67, %v56
    %69 = vst.msk [vmem:[#allocation3 + $0x8] sm:$0xff] %vm67, %v58
    %70 = vst.msk [vmem:[#allocation3 + $0x10] sm:$0xff] %vm67, %v60
    %71 = vst.msk [vmem:[#allocation3 + $0x18] sm:$0xff] %vm67, %v62
    %v72 = vld [vmem:[#allocation2] sm:$0xff]
    %v73 = vld [vmem:[#allocation2 + $0x8] sm:$0xff]
    %v74 = vld [vmem:[#allocation2 + $0x10] sm:$0xff]
    %v75 = vld [vmem:[#allocation2 + $0x18] sm:$0xff]
    %vm76 = vcmask 130168
    %77 = vst.msk [vmem:[#allocation3] sm:$0xff] %vm76, %v72
    %78 = vst.msk [vmem:[#allocation3 + $0x8] sm:$0xff] %vm76, %v73
    %79 = vst.msk [vmem:[#allocation3 + $0x10] sm:$0xff] %vm76, %v74
    %80 = vst.msk [vmem:[#allocation3 + $0x18] sm:$0xff] %vm76, %v75
    %v81 = vld [vmem:[#allocation3] sm:$0xff]
    %v82 = vld [vmem:[#allocation3 + $0x8] sm:$0xff]
    %v83 = vld [vmem:[#allocation3 + $0x10] sm:$0xff]
    %v84 = vld [vmem:[#allocation3 + $0x18] sm:$0xff]
    %v85 = vmax.f32 %v38, %v81
    %v86 = vmax.f32 %v39, %v82
    %v87 = vmax.f32 %v40, %v83
    %v88 = vmax.f32 %v41, %v84
    %89 = vst.msk [vmem:[#allocation2] sm:$0xff] %vm42, %v85
    %90 = vst.msk [vmem:[#allocation2 + $0x8] sm:$0xff] %vm42, %v86
    %91 = vst.msk [vmem:[#allocation2 + $0x10] sm:$0xff] %vm42, %v87
    %92 = vst.msk [vmem:[#allocation2 + $0x18] sm:$0xff] %vm42, %v88
    %v93 = vld [vmem:[#allocation2] sm:$0xff]
    %v94 = vld [vmem:[#allocation2 + $0x8] sm:$0xff]
    %v95 = vld [vmem:[#allocation2 + $0x10] sm:$0xff]
    %v96 = vld [vmem:[#allocation2 + $0x18] sm:$0xff]
    %101 = vrot.lane.b32.xlu0 %v93, 127
    %v102 = vpop.permute.xlu0 %101
    %103 = vrot.lane.b32.xlu0 %v94, 127
    %v104 = vpop.permute.xlu0 %103
    %105 = vrot.lane.b32.xlu0 %v95, 127
    %v106 = vpop.permute.xlu0 %105
    %107 = vrot.lane.b32.xlu0 %v96, 127
    %v108 = vpop.permute.xlu0 %107
    %113 = vst.msk [vmem:[#allocation3] sm:$0xff] %vm67, %v102
    %114 = vst.msk [vmem:[#allocation3 + $0x8] sm:$0xff] %vm67, %v104
    %115 = vst.msk [vmem:[#allocation3 + $0x10] sm:$0xff] %vm67, %v106
    %116 = vst.msk [vmem:[#allocation3 + $0x18] sm:$0xff] %vm67, %v108
    %v117 = vld [vmem:[#allocation2] sm:$0xff]
    %v118 = vld [vmem:[#allocation2 + $0x8] sm:$0xff]
    %v119 = vld [vmem:[#allocation2 + $0x10] sm:$0xff]
    %v120 = vld [vmem:[#allocation2 + $0x18] sm:$0xff]
    %121 = vst.msk [vmem:[#allocation3] sm:$0xff] %vm76, %v117
    %122 = vst.msk [vmem:[#allocation3 + $0x8] sm:$0xff] %vm76, %v118
    %123 = vst.msk [vmem:[#allocation3 + $0x10] sm:$0xff] %vm76, %v119
    %124 = vst.msk [vmem:[#allocation3 + $0x18] sm:$0xff] %vm76, %v120
    %v125 = vand.u32 %v9, 3
    %vm126 = vcmp.eq.s32.totalorder %v125, 1
    %v127 = vld [vmem:[#allocation3] sm:$0xff]
    %v128 = vld [vmem:[#allocation3 + $0x8] sm:$0xff]
    %v129 = vld [vmem:[#allocation3 + $0x10] sm:$0xff]
    %v130 = vld [vmem:[#allocation3 + $0x18] sm:$0xff]
    %v131 = vsel %vm126, %v127, %v85
    %v132 = vsel %vm126, %v128, %v86
    %v133 = vsel %vm126, %v129, %v87
    %v134 = vsel %vm126, %v130, %v88
    %135 = vst.msk [vmem:[#allocation2] sm:$0xff] %vm42, %v131
    %136 = vst.msk [vmem:[#allocation2 + $0x8] sm:$0xff] %vm42, %v132
    %137 = vst.msk [vmem:[#allocation2 + $0x10] sm:$0xff] %vm42, %v133
    %138 = vst.msk [vmem:[#allocation2 + $0x18] sm:$0xff] %vm42, %v134
    %v139 = vld [vmem:[#allocation2] sm:$0xff]
    %v140 = vld [vmem:[#allocation2 + $0x8] sm:$0xff]
    %v141 = vld [vmem:[#allocation2 + $0x10] sm:$0xff]
    %v142 = vld [vmem:[#allocation2 + $0x18] sm:$0xff]
    %147 = vrot.lane.b32.xlu0 %v139, 126
    %v148 = vpop.permute.xlu0 %147
    %149 = vrot.lane.b32.xlu0 %v140, 126
    %v150 = vpop.permute.xlu0 %149
    %151 = vrot.lane.b32.xlu0 %v141, 126
    %v152 = vpop.permute.xlu0 %151
    %153 = vrot.lane.b32.xlu0 %v142, 126
    %v154 = vpop.permute.xlu0 %153
    %vm159 = vcmask 113664
    %160 = vst.msk [vmem:[#allocation3] sm:$0xff] %vm159, %v148
    %161 = vst.msk [vmem:[#allocation3 + $0x8] sm:$0xff] %vm159, %v150
    %162 = vst.msk [vmem:[#allocation3 + $0x10] sm:$0xff] %vm159, %v152
    %163 = vst.msk [vmem:[#allocation3 + $0x18] sm:$0xff] %vm159, %v154
    %v164 = vld [vmem:[#allocation2] sm:$0xff]
    %v165 = vld [vmem:[#allocation2 + $0x8] sm:$0xff]
    %v166 = vld [vmem:[#allocation2 + $0x10] sm:$0xff]
    %v167 = vld [vmem:[#allocation2 + $0x18] sm:$0xff]
    %vm168 = vcmask 130160
    %169 = vst.msk [vmem:[#allocation3] sm:$0xff] %vm168, %v164
    %170 = vst.msk [vmem:[#allocation3 + $0x8] sm:$0xff] %vm168, %v165
    %171 = vst.msk [vmem:[#allocation3 + $0x10] sm:$0xff] %vm168, %v166
    %172 = vst.msk [vmem:[#allocation3 + $0x18] sm:$0xff] %vm168, %v167
    %v173 = vshra.s32 %v9, 1
    %v174 = vand.u32 %v173, 3
    %vm175 = vcmp.eq.s32.totalorder %v174, 1
    %v176 = vld [vmem:[#allocation3] sm:$0xff]
    %v177 = vld [vmem:[#allocation3 + $0x8] sm:$0xff]
    %v178 = vld [vmem:[#allocation3 + $0x10] sm:$0xff]
    %v179 = vld [vmem:[#allocation3 + $0x18] sm:$0xff]
    %v180 = vsel %vm175, %v176, %v131
    %v181 = vsel %vm175, %v177, %v132
    %v182 = vsel %vm175, %v178, %v133
    %v183 = vsel %vm175, %v179, %v134
    %184 = vst.msk [vmem:[#allocation2] sm:$0xff] %vm42, %v180
    %185 = vst.msk [vmem:[#allocation2 + $0x8] sm:$0xff] %vm42, %v181
    %186 = vst.msk [vmem:[#allocation2 + $0x10] sm:$0xff] %vm42, %v182
    %187 = vst.msk [vmem:[#allocation2 + $0x18] sm:$0xff] %vm42, %v183
    %v188 = vld [vmem:[#allocation2] sm:$0xff]
    %v189 = vld [vmem:[#allocation2 + $0x8] sm:$0xff]
    %v190 = vld [vmem:[#allocation2 + $0x10] sm:$0xff]
    %v191 = vld [vmem:[#allocation2 + $0x18] sm:$0xff]
    %196 = vrot.lane.b32.xlu0 %v188, 124
    %v197 = vpop.permute.xlu0 %196
    %198 = vrot.lane.b32.xlu0 %v189, 124
    %v199 = vpop.permute.xlu0 %198
    %200 = vrot.lane.b32.xlu0 %v190, 124
    %v201 = vpop.permute.xlu0 %200
    %202 = vrot.lane.b32.xlu0 %v191, 124
    %v203 = vpop.permute.xlu0 %202
    %vm208 = vcmask 97280
    %209 = vst.msk [vmem:[#allocation3] sm:$0xff] %vm208, %v197
    %210 = vst.msk [vmem:[#allocation3 + $0x8] sm:$0xff] %vm208, %v199
    %211 = vst.msk [vmem:[#allocation3 + $0x10] sm:$0xff] %vm208, %v201
    %212 = vst.msk [vmem:[#allocation3 + $0x18] sm:$0xff] %vm208, %v203
    %v213 = vld [vmem:[#allocation2] sm:$0xff]
    %v214 = vld [vmem:[#allocation2 + $0x8] sm:$0xff]
    %v215 = vld [vmem:[#allocation2 + $0x10] sm:$0xff]
    %v216 = vld [vmem:[#allocation2 + $0x18] sm:$0xff]
    %vm217 = vcmask 130144
    %218 = vst.msk [vmem:[#allocation3] sm:$0xff] %vm217, %v213
    %219 = vst.msk [vmem:[#allocation3 + $0x8] sm:$0xff] %vm217, %v214
    %220 = vst.msk [vmem:[#allocation3 + $0x10] sm:$0xff] %vm217, %v215
    %221 = vst.msk [vmem:[#allocation3 + $0x18] sm:$0xff] %vm217, %v216
    %v222 = vshra.s32 %v9, 2
    %v223 = vand.u32 %v222, 3
    %vm224 = vcmp.eq.s32.totalorder %v223, 1
    %v225 = vld [vmem:[#allocation3] sm:$0xff]
    %v226 = vld [vmem:[#allocation3 + $0x8] sm:$0xff]
    %v227 = vld [vmem:[#allocation3 + $0x10] sm:$0xff]
    %v228 = vld [vmem:[#allocation3 + $0x18] sm:$0xff]
    %v229 = vsel %vm224, %v225, %v180
    %v230 = vsel %vm224, %v226, %v181
    %v231 = vsel %vm224, %v227, %v182
    %v232 = vsel %vm224, %v228, %v183
    %s233 = scalar_lea.vmem %s1, %s16
    %vm234 = vcmask 64512
    %235 = vst.msk [vmem:[%s233] sm:$0xff] %vm234, %v229
    %236 = vst.msk [vmem:[%s233 + $0x8] sm:$0xff] %vm234, %v230
    %237 = vst.msk [vmem:[%s233 + $0x10] sm:$0xff] %vm234, %v231
    %238 = vst.msk [vmem:[%s233 + $0x18] sm:$0xff] %vm234, %v232
  $region10: #{tpu_custom_call.1} parent=0 // loop_footer
    %s15 = sadd.s32 1, %s11
  $region11: #{tpu_custom_call.1} parent=0 // loop_footer_branch
    %10 = sbr.rel target = $region7
  $region12: #{tpu_custom_call.1} parent=0 // loop_exit
    _
  // Predicated region
  $region13: #{tpu_custom_call.1} parent=0 // pred_check
    _
  $region14: #{tpu_custom_call.1} parent=0 // pred_check_branch
    %240 = sbr.rel (0) target = $region16
  $region15: #{tpu_custom_call.1} parent=0 // pred_region
    _
  $region16: #{tpu_custom_call.1} parent=0 // pred_fallthru
    _
  // Predicated region
  $region17: #{tpu_custom_call.1} parent=0 // pred_check
    _
  $region18: #{tpu_custom_call.1} parent=0 // pred_check_branch
    %242 = sbr.rel (0) target = $region20
  $region19: #{tpu_custom_call.1} parent=0 // pred_region
    _
  $region20: #{tpu_custom_call.1} parent=0 // pred_fallthru
    _

</llo_original>
